<compile_context>
chip_gen: v7x
topology: tpu7x:2x2x1
jax: 0.10.0
libtpu: 0.0.40
codegen_flags: <defaults>
</compile_context>

<pallas_src>
import jax
import jax.numpy as jnp
from jax.experimental import pallas as pl
from jax.experimental.pallas import tpu as pltpu


def attention_kernel(x_ref, w_ref, b_ref, uo_ref, ctx_ref, attw_ref):
    tb, S, H = x_ref.shape
    x = x_ref[...]              # (tb, S, H)  input dtype (f32 here)
    w = w_ref[...]              # (H, H)      bf16, VMEM-resident across steps
    b = b_ref[...]              # (1, H)      f32
    uo = uo_ref[...]            # (1, H)      f32

    # --- u = tanh(x @ w + b): one well-shaped 2D MXU matmul, bf16 inputs,
    # f32 accumulation (M = tb*S). S is a multiple of 8 at the test sizes so
    # the (tb,S,H) -> (tb*S,H) collapse is a layout no-op.
    x2 = x.reshape(tb * S, H).astype(jnp.bfloat16)
    u = jnp.tanh(jnp.dot(x2, w, preferred_element_type=jnp.float32) + b)
    # TODO(synk): on v6e/v7x the tanh/exp could run packed-bf16 on the EUP
    # (~2x EUP throughput); needs chip-conditional codegen, kept f32 here.

    # --- att = u @ u_omega as VPU multiply + cross-lane reduce (avoids an
    # N=1 MXU matmul that would use 1/256 of the MXU width) -----------------
    att = jnp.sum(u * uo, axis=-1).reshape(tb, S)            # (tb, S)

    # --- max-stabilized softmax over the sequence axis; exact divide (the
    # denominator is only (tb, 1) elements, approx reciprocal buys nothing).
    m = jnp.max(att, axis=1, keepdims=True)
    p = jnp.exp(att - m)
    weight = p / jnp.sum(p, axis=1, keepdims=True)            # (tb, S)

    # --- context = sum_s x[b, s, :] * weight[b, s] --------------------------
    ctx = jnp.sum(x.astype(jnp.float32) * weight[:, :, None], axis=1)  # (tb,H)

    ctx_ref[...] = ctx.astype(ctx_ref.dtype)
    attw_ref[...] = weight.astype(attw_ref.dtype)
    # TODO(synk): for very long S, tile over S with an online-softmax
    # (flash-style) pass so the f32 intermediates never materialize in full.


def _vmem_budget_bytes():
    """~72% of physical VMEM (~92 MiB on v5e/v6e, ~46 MiB on v7x)."""
    try:
        cap = int(pltpu.get_tpu_info().vmem_capacity_bytes)
    except Exception:
        cap = 64 << 20          # conservative fallback (v7x-sized VMEM)
    return int(cap * 0.72)


def _per_row_bytes(S, H, itemsize):
    # VMEM bytes per batch row inside one grid step:
    #   x tile double-buffered + bf16 matmul copy + f32 `u`
    #   + f32 x*weight product + double-buffered output rows
    return S * H * (2 * itemsize + 2 + 4 + 4) + 2 * (H + S) * itemsize


def _fixed_bytes(H):
    # resident weights (w bf16, b/uo f32, double-buffer factor) + slack
    return 2 * (H * H * 2 + 2 * H * 4) + (1 << 20)


def _pick_batch_tile(B, S, H, itemsize, budget):
    b_pad8 = ((B + 7) // 8) * 8
    per_row = _per_row_bytes(S, H, itemsize)
    tb_max = max(8, ((budget - _fixed_bytes(H)) // per_row) // 8 * 8)
    tb = min(tb_max, b_pad8)
    # guarantee >= 2 grid steps when the batch allows it so the "parallel"
    # batch axis can shard across both TensorCores on v7x
    if B > 8:
        tb = min(tb, max(8, 8 * ((B - 1) // 8)))
    return max(8, tb)


def attention_forward(encoder_outputs, w_omega, b_omega, u_omega):
    B, S, H = encoder_outputs.shape
    dtype = encoder_outputs.dtype
    itemsize = jnp.dtype(dtype).itemsize

    budget = _vmem_budget_bytes()
    tb = _pick_batch_tile(B, S, H, itemsize, budget)

    # zero-pad the batch to a multiple of the tile (rows sliced off below)
    b_pad = ((B + tb - 1) // tb) * tb
    x = encoder_outputs
    if b_pad != B:
        x = jnp.pad(x, ((0, b_pad - B), (0, 0), (0, 0)))
    grid = (b_pad // tb,)

    w_bf = w_omega.astype(jnp.bfloat16)                 # MXU-native, halves w HBM read
    b2d = b_omega.reshape(1, H).astype(jnp.float32)
    uo2d = u_omega.reshape(1, H).astype(jnp.float32)

    needed = tb * _per_row_bytes(S, H, itemsize) + _fixed_bytes(H)
    vmem_limit = int(min(budget, max(2 * needed, 16 << 20)))

    cost = pl.CostEstimate(
        flops=2 * b_pad * S * H * H + 6 * b_pad * S * H,
        transcendentals=b_pad * S * H + b_pad * S,
        bytes_accessed=(b_pad * S * H * itemsize + H * H * 2 + 2 * H * 4
                        + b_pad * (H + S) * itemsize),
    )

    # TODO(synk): if profiling shows exposed writeback from the narrow (tb,H)
    # ctx stores, pad the output slab's last dim to 128 (wrapper-side slice).
    context, att_weight = pl.pallas_call(
        attention_kernel,
        grid=grid,
        in_specs=[
            pl.BlockSpec((tb, S, H), lambda i: (i, 0, 0)),
            pl.BlockSpec((H, H), lambda i: (0, 0)),   # constant -> VMEM-resident
            pl.BlockSpec((1, H), lambda i: (0, 0)),
            pl.BlockSpec((1, H), lambda i: (0, 0)),
        ],
        out_specs=(
            pl.BlockSpec((tb, H), lambda i: (i, 0)),
            pl.BlockSpec((tb, S), lambda i: (i, 0)),
        ),
        out_shape=(
            jax.ShapeDtypeStruct((b_pad, H), dtype),
            jax.ShapeDtypeStruct((b_pad, S), dtype),
        ),
        compiler_params=pltpu.CompilerParams(
            dimension_semantics=("parallel",),
            vmem_limit_bytes=vmem_limit,
        ),
        cost_estimate=cost,
    )(x, w_bf, b2d, uo2d)

    if b_pad != B:
        context = context[:B]
        att_weight = att_weight[:B]
    return context, att_weight


def reference_forward(x, w, b, uo):
    # pure-JAX reference mirroring the PyTorch code (f32 throughout)
    u = jnp.tanh(jnp.matmul(x, w) + b)
    att = jnp.matmul(u, uo)                       # (B, S, 1)
    att_weight = jax.nn.softmax(att, axis=1)
    context = jnp.sum(x * att_weight, axis=1)
    return context, att_weight[..., 0]


if __name__ == "__main__":
    B, S, H = 2, 8, 32
    key = jax.random.PRNGKey(0)
    kx, kw, kb, ku = jax.random.split(key, 4)

    # deterministic parameter init matching nn.init.uniform_(-0.1, 0.1)
    x = jax.random.normal(kx, (B, S, H), dtype=jnp.float32)
    w_omega = jax.random.uniform(kw, (H, H), minval=-0.1, maxval=0.1,
                                 dtype=jnp.float32)
    b_omega = jax.random.uniform(kb, (H,), minval=-0.1, maxval=0.1,
                                 dtype=jnp.float32)
    u_omega = jax.random.uniform(ku, (H, 1), minval=-0.1, maxval=0.1,
                                 dtype=jnp.float32)

    context, att_weight = attention_forward(x, w_omega, b_omega, u_omega)
    jax.block_until_ready((context, att_weight))

    ref_ctx, ref_attw = reference_forward(x, w_omega, b_omega, u_omega)
    assert context.shape == (B, H) and att_weight.shape == (B, S)
    # bf16 MXU inputs (f32 accumulate) vs. the f32 reference -> modest tolerance
    assert jnp.allclose(context, ref_ctx, atol=1e-2, rtol=1e-2)
    assert jnp.allclose(att_weight, ref_attw, atol=1e-2, rtol=1e-2)
    # softmax uses an exact divide, so weights sum to 1
    assert jnp.allclose(jnp.sum(att_weight, axis=1), 1.0, atol=1e-5)

    print("KERNEL_OK")
</pallas_src>

<mosaic_0001>
module attributes {stable_mosaic.version = 11 : i64} {
  func.func @attention_kernel(%arg0: i32, %arg1: memref<8x8x32xf32, #tpu.memory_space<vmem>>, %arg2: memref<32x32xbf16, #tpu.memory_space<vmem>>, %arg3: memref<1x32xf32, #tpu.memory_space<vmem>>, %arg4: memref<1x32xf32, #tpu.memory_space<vmem>>, %arg5: memref<8x32xf32, #tpu.memory_space<vmem>>, %arg6: memref<8x8xf32, #tpu.memory_space<vmem>>) attributes {dimension_semantics = [#tpu.dimension_semantics<parallel>], iteration_bounds = array<i64: 1>, scalar_prefetch = 0 : i64, scratch_operands = 0 : i64, tpu.core_type = #tpu.core_type<tc>, window_params = [{transform_indices = @transform_0, window_bounds = array<i64: 8, 8, 32>}, {pipeline_mode = #tpu.pipeline_mode<synchronous>, transform_indices = @transform_1, window_bounds = array<i64: 32, 32>}, {pipeline_mode = #tpu.pipeline_mode<synchronous>, transform_indices = @transform_2, window_bounds = array<i64: 1, 32>}, {pipeline_mode = #tpu.pipeline_mode<synchronous>, transform_indices = @transform_3, window_bounds = array<i64: 1, 32>}, {transform_indices = @transform_4, window_bounds = array<i64: 8, 32>}, {transform_indices = @transform_5, window_bounds = array<i64: 8, 8>}]} {
    %c0 = arith.constant 0 : index
    %c0_0 = arith.constant 0 : index
    %c0_1 = arith.constant 0 : index
    %0 = vector.load %arg1[%c0, %c0_0, %c0_1] : memref<8x8x32xf32, #tpu.memory_space<vmem>>, vector<8x8x32xf32>
    %c0_2 = arith.constant 0 : index
    %c0_3 = arith.constant 0 : index
    %1 = vector.load %arg2[%c0_2, %c0_3] : memref<32x32xbf16, #tpu.memory_space<vmem>>, vector<32x32xbf16>
    %c0_4 = arith.constant 0 : index
    %c0_5 = arith.constant 0 : index
    %2 = vector.load %arg3[%c0_4, %c0_5] : memref<1x32xf32, #tpu.memory_space<vmem>>, vector<1x32xf32>
    %c0_6 = arith.constant 0 : index
    %c0_7 = arith.constant 0 : index
    %3 = vector.load %arg4[%c0_6, %c0_7] : memref<1x32xf32, #tpu.memory_space<vmem>>, vector<1x32xf32>
    %4 = vector.shape_cast %0 : vector<8x8x32xf32> to vector<64x32xf32>
    %5 = arith.truncf %4 : vector<64x32xf32> to vector<64x32xbf16>
    %cst = arith.constant dense<0.000000e+00> : vector<64x32xf32>
    %6 = tpu.matmul %5, %1, %cst {dimension_numbers = #tpu.dot_dimension_numbers<[1], [0], [0], [1], [0, 0, 1, 1], [], []>} : vector<64x32xbf16>, vector<32x32xbf16>, vector<64x32xf32> -> vector<64x32xf32>
    %7 = vector.broadcast %2 : vector<1x32xf32> to vector<64x32xf32>
    %8 = arith.addf %6, %7 : vector<64x32xf32>
    %9 = math.tanh %8 : vector<64x32xf32>
    %10 = vector.broadcast %3 : vector<1x32xf32> to vector<64x32xf32>
    %11 = arith.mulf %9, %10 : vector<64x32xf32>
    %cst_8 = arith.constant dense<0.000000e+00> : vector<64xf32>
    %12 = vector.multi_reduction <add>, %11, %cst_8 [1] : vector<64x32xf32> to vector<64xf32>
    %13 = vector.shape_cast %12 : vector<64xf32> to vector<8x8xf32>
    %cst_9 = arith.constant dense<0xFF800000> : vector<8xf32>
    %14 = vector.multi_reduction <maximumf>, %13, %cst_9 [1] : vector<8x8xf32> to vector<8xf32>
    %15 = vector.shape_cast %14 : vector<8xf32> to vector<8x1xf32>
    %16 = vector.broadcast %15 : vector<8x1xf32> to vector<8x8xf32>
    %17 = arith.subf %13, %16 : vector<8x8xf32>
    %18 = math.exp %17 : vector<8x8xf32>
    %cst_10 = arith.constant dense<0.000000e+00> : vector<8xf32>
    %19 = vector.multi_reduction <add>, %18, %cst_10 [1] : vector<8x8xf32> to vector<8xf32>
    %20 = vector.shape_cast %19 : vector<8xf32> to vector<8x1xf32>
    %21 = vector.broadcast %20 : vector<8x1xf32> to vector<8x8xf32>
    %22 = arith.divf %18, %21 : vector<8x8xf32>
    %23 = vector.shape_cast %22 : vector<8x8xf32> to vector<8x8x1xf32>
    %24 = vector.broadcast %23 : vector<8x8x1xf32> to vector<8x8x32xf32>
    %25 = arith.mulf %0, %24 : vector<8x8x32xf32>
    %cst_11 = arith.constant dense<0.000000e+00> : vector<8x32xf32>
    %26 = vector.multi_reduction <add>, %25, %cst_11 [1] : vector<8x8x32xf32> to vector<8x32xf32>
    %c0_12 = arith.constant 0 : index
    %c0_13 = arith.constant 0 : index
    %27 = vector.load %arg5[%c0_12, %c0_13] : memref<8x32xf32, #tpu.memory_space<vmem>>, vector<8x32xf32>
    tpu.vector_store %arg5[%c0_12, %c0_13], %26 {strides = array<i32>} : memref<8x32xf32, #tpu.memory_space<vmem>>, vector<8x32xf32>,
    %c0_14 = arith.constant 0 : index
    %c0_15 = arith.constant 0 : index
    %28 = vector.load %arg6[%c0_14, %c0_15] : memref<8x8xf32, #tpu.memory_space<vmem>>, vector<8x8xf32>
    tpu.vector_store %arg6[%c0_14, %c0_15], %22 {strides = array<i32>} : memref<8x8xf32, #tpu.memory_space<vmem>>, vector<8x8xf32>,
    return
  }
  func.func @transform_0(%arg0: i32) -> (i32, i32, i32) {
    %c0_i32 = arith.constant 0 : i32
    %c0_i32_0 = arith.constant 0 : i32
    %c0_i32_1 = arith.constant 0 : i32
    return %arg0, %c0_i32, %c0_i32_0 : i32, i32, i32
  }
  func.func @transform_1(%arg0: i32) -> (i32, i32) {
    %c0_i32 = arith.constant 0 : i32
    %c0_i32_0 = arith.constant 0 : i32
    %c0_i32_1 = arith.constant 0 : i32
    return %c0_i32, %c0_i32_0 : i32, i32
  }
  func.func @transform_2(%arg0: i32) -> (i32, i32) {
    %c0_i32 = arith.constant 0 : i32
    %c0_i32_0 = arith.constant 0 : i32
    %c0_i32_1 = arith.constant 0 : i32
    return %c0_i32, %c0_i32_0 : i32, i32
  }
  func.func @transform_3(%arg0: i32) -> (i32, i32) {
    %c0_i32 = arith.constant 0 : i32
    %c0_i32_0 = arith.constant 0 : i32
    %c0_i32_1 = arith.constant 0 : i32
    return %c0_i32, %c0_i32_0 : i32, i32
  }
  func.func @transform_4(%arg0: i32) -> (i32, i32) {
    %c0_i32 = arith.constant 0 : i32
    %c0_i32_0 = arith.constant 0 : i32
    return %arg0, %c0_i32 : i32, i32
  }
  func.func @transform_5(%arg0: i32) -> (i32, i32) {
    %c0_i32 = arith.constant 0 : i32
    %c0_i32_0 = arith.constant 0 : i32
    return %arg0, %c0_i32 : i32, i32
  }
}

</mosaic_0001>

<llo_original>
// kernel: tpu_custom_call.1
$region0: #{tpu_custom_call.1}
  #allocation0 [shape = 'u32[]', space=smem, size = 0x4, offset = 0x4, fixed_abs, tag = 'smem constant byte address 0x4 - core index']
  #allocation1 [shape = 'u32[144,128]{1,0:T(1,128)}', space=vmem, size = 0x12000, scoped, tag = 'internal scratch']
  %s0 = inlined_call_operand.hbm [shape: f32[8,8,32], index: 0, kind: input, shape index: {}]
  %s1 = inlined_call_operand.hbm [shape: bf16[32,32], index: 1, kind: input, shape index: {}]
  %s2 = inlined_call_operand.vmem [shape: f32[1,32], index: 2, kind: input, shape index: {}]
  %s3 = inlined_call_operand.vmem [shape: f32[1,32], index: 3, kind: input, shape index: {}]
  %s4 = inlined_call_operand.hbm [shape: f32[8,32], index: 4, kind: output, shape index: {0}]
  %s5 = inlined_call_operand.hbm [shape: f32[8,8], index: 5, kind: output, shape index: {1}]
  %6 = xla_tuple %s4, %s5
  %s7 = sld [smem:[#allocation0]]
  $region42: #{tpu_custom_call.1} parent=0
    _
  %s9 = ssub.s32 1, %s7
  %s10 = scalar_select 0, %s9, %s7
  $region1: #{tpu_custom_call.1} parent=0
    #allocation2 [shape = 'u8[32768]{0}', space=vmem, size = 0x8000, scoped, tag = 'input window, operand 0, single buffered']
    #allocation3 [shape = 's32[1]{0}', space=sflag, size = 0x4, scoped, tag = 'scoped memory for tpu_custom_call.1']
    #allocation4 [shape = 's32[1]{0}', space=sflag, size = 0x4, scoped, tag = 'scoped memory for tpu_custom_call.1']
    #allocation5 [shape = 'u8[8192]{0}', space=vmem, size = 0x2000, scoped, tag = 'input window, operand 1, single buffered']
    #allocation6 [shape = 's32[1]{0}', space=sflag, size = 0x4, scoped, tag = 'scoped memory for tpu_custom_call.1']
    #allocation7 [shape = 'u8[4096]{0}', space=vmem, size = 0x1000, scoped, tag = 'output window, operand 0, single buffered']
    #allocation8 [shape = 'u8[4096]{0}', space=vmem, size = 0x1000, scoped, tag = 'output window, operand 1, single buffered']
    #allocation9 [shape = 's32[1]{0}', space=sflag, size = 0x4, scoped, tag = 'scoped memory for tpu_custom_call.1']
    %11 = vsyncpa [#allocation3], 0
    %12 = vsyncpa [#allocation6], 0
    %13 = vsyncpa [#allocation4], 0
    %14 = vsyncpa [#allocation9], 0
    // Predicated region
    $region2: #{tpu_custom_call.1} parent=1 // pred_check
      _
    $region3: #{tpu_custom_call.1} parent=1 // pred_check_branch
      %16 = sbr.rel (0) target = $region5
    $region4: #{tpu_custom_call.1} parent=1 // pred_region
      %s18 = ssub.s32 1024, 1024
      %19 = vsyncadd [#allocation3], %s18
      %s20 = sshll.u32 [#allocation2], 4
      %s21 = int_to_ptr.vmem [resolvable:$true] %s20
      %26 = dma.hbm_to_vmem [thread:$0]  %s0, 1024, %s21, [#allocation3], 128, 128, 8
    $region5: #{tpu_custom_call.1} parent=1 // pred_fallthru
      _
    // Predicated region
    $region6: #{tpu_custom_call.1} parent=1 // pred_check
      _
    $region7: #{tpu_custom_call.1} parent=1 // pred_check_branch
      %28 = sbr.rel (0) target = $region9
    $region8: #{tpu_custom_call.1} parent=1 // pred_region
      %s30 = ssub.s32 256, 256
      %31 = vsyncadd [#allocation6], %s30
      %s32 = sshll.u32 [#allocation5], 4
      %s33 = int_to_ptr.vmem [resolvable:$true] %s32
      %38 = dma.hbm_to_vmem [thread:$0]  %s1, 256, %s33, [#allocation6], 64, 64, 4
    $region9: #{tpu_custom_call.1} parent=1 // pred_fallthru
      _
    // Predicated region
    $region10: #{tpu_custom_call.1} parent=1 // pred_check
      _
    $region11: #{tpu_custom_call.1} parent=1 // pred_check_branch
      %40 = sbr.rel (0) target = $region13
    $region12: #{tpu_custom_call.1} parent=1 // pred_region
      _
    $region13: #{tpu_custom_call.1} parent=1 // pred_fallthru
      _
    // Predicated region
    $region14: #{tpu_custom_call.1} parent=1 // pred_check
      _
    $region15: #{tpu_custom_call.1} parent=1 // pred_check_branch
      %42 = sbr.rel (0) target = $region17
    $region16: #{tpu_custom_call.1} parent=1 // pred_region
      _
    $region17: #{tpu_custom_call.1} parent=1 // pred_fallthru
      _
    // Predicated region
    $region18: #{tpu_custom_call.1} parent=1 // pred_check
      _
    $region19: #{tpu_custom_call.1} parent=1 // pred_check_branch
      %44 = sbr.rel (0) target = $region21
    $region20: #{tpu_custom_call.1} parent=1 // pred_region
      %45 = dma.done [#allocation3], 1024
    $region21: #{tpu_custom_call.1} parent=1 // pred_fallthru
      _
    // Predicated region
    $region22: #{tpu_custom_call.1} parent=1 // pred_check
      _
    $region23: #{tpu_custom_call.1} parent=1 // pred_check_branch
      %47 = sbr.rel (0) target = $region25
    $region24: #{tpu_custom_call.1} parent=1 // pred_region
      %48 = dma.done [#allocation6], 256
    $region25: #{tpu_custom_call.1} parent=1 // pred_fallthru
      _
    %v50 = vld [vmem:[#allocation2] sm:$0xff]
    %v51 = vld [vmem:[#allocation2 + $0x8] sm:$0xff]
    %v52 = vld [vmem:[#allocation2 + $0x10] sm:$0xff]
    %v53 = vld [vmem:[#allocation2 + $0x18] sm:$0xff]
    %v54 = vld [vmem:[#allocation2 + $0x20] sm:$0xff]
    %v55 = vld [vmem:[#allocation2 + $0x28] sm:$0xff]
    %v56 = vld [vmem:[#allocation2 + $0x30] sm:$0xff]
    %v57 = vld [vmem:[#allocation2 + $0x38] sm:$0xff]
    %v58 = vld [vmem:[#allocation5] sm:$0xf]
    %v59 = vld [vmem:[#allocation5 + $0x4] sm:$0xf]
    %v60 = vld [vmem:[#allocation5 + $0x8] sm:$0xf]
    %v61 = vld [vmem:[#allocation5 + $0xc] sm:$0xf]
    %v62 = vld [vmem:[%s2] sm:$0x1]
    %v63 = vld [vmem:[%s3] sm:$0x1]
    %v64 = vpack.c.bf16 %v51, %v50
    %v65 = vpack.c.bf16 %v53, %v52
    %v66 = vpack.c.bf16 %v55, %v54
    %v67 = vpack.c.bf16 %v57, %v56
    %v69 = vlaneseq
    %v70 = vshrl.u32 %v69, 7
    %v71 = vsub.s32 0, %v70
    %v72 = vrot.slane %v62, %v71
    %v78 = vunpack.c.l.b16 %v58
    %v79 = vunpack.c.l.b16 %v59
    %v80 = vunpack.c.l.b16 %v60
    %v81 = vunpack.c.l.b16 %v61
    %v82 = vpack.c.b16 %v79, %v78
    %v83 = vpack.c.b16 %v81, %v80
    %vm86 = vcmask 261120
    %v88 = vsel %vm86, %v64, 0
    %v91 = vsel %vm86, %v65, 0
    %v94 = vsel %vm86, %v66, 0
    %v97 = vsel %vm86, %v67, 0
    %99 = vmatprep.subr.bf16.mxu0 0
    %100 = vmatpush1.bf16.msra.mxu0 %v82
    %101 = vmatprep.subr.bf16.mxu0 0
    %102 = vmatpush1.bf16.msra.mxu0 %v83
    %103 = vmatprep.subr.bf16.mxu0 0
    %104 = vmatpush1.bf16.msra.mxu0 0
    %105 = vmatprep.subr.bf16.mxu0 0
    %106 = vmatpush1.bf16.msra.mxu0 0
    %107 = vmatprep.subr.bf16.mxu0 0
    %108 = vmatpush1.bf16.msra.mxu0 0
    %109 = vmatprep.subr.bf16.mxu0 0
    %110 = vmatpush1.bf16.msra.mxu0 0
    %111 = vmatprep.subr.bf16.mxu0 0
    %112 = vmatpush1.bf16.msra.mxu0 0
    %113 = vmatprep.subr.bf16.mxu0 0
    %114 = vmatpush1.bf16.msra.mxu0 0
    %115 = vmatprep.subr.bf16.mxu0 0
    %116 = vmatpush1.bf16.msra.mxu0 0
    %117 = vmatprep.subr.bf16.mxu0 0
    %118 = vmatpush1.bf16.msra.mxu0 0
    %119 = vmatprep.subr.bf16.mxu0 0
    %120 = vmatpush1.bf16.msra.mxu0 0
    %121 = vmatprep.subr.bf16.mxu0 0
    %122 = vmatpush1.bf16.msra.mxu0 0
    %123 = vmatprep.subr.bf16.mxu0 0
    %124 = vmatpush1.bf16.msra.mxu0 0
    %125 = vmatprep.subr.bf16.mxu0 0
    %126 = vmatpush1.bf16.msra.mxu0 0
    %127 = vmatprep.subr.bf16.mxu0 0
    %128 = vmatpush1.bf16.msra.mxu0 0
    %129 = vmatprep.subr.bf16.mxu0 0
    %130 = vmatpush1.bf16.msra.mxu0 0
    %131 = vmatprep.mubr.bf16.mxu0 0
    %132 = vmatmul.mubr.bf16.gmra.mrb[0].mxu0 %v88
    %v133 = vpop.f32.mrb[0].mxu0
    %v134 = vadd.f32 %v72, %v133
    %v135 = vpop.f32.mrb[0].mxu0
    %v136 = vpop.f32.mrb[0].mxu0
    %v137 = vadd.f32 %v72, %v136
    %v138 = vpop.f32.mrb[0].mxu0
    %139 = vmatprep.mubr.bf16.mxu0 0
    %140 = vmatmul.mubr.bf16.gmra.mrb[0].mxu0 %v91
    %v141 = vpop.f32.mrb[0].mxu0
    %v142 = vadd.f32 %v72, %v141
    %v143 = vpop.f32.mrb[0].mxu0
    %v144 = vpop.f32.mrb[0].mxu0
    %v145 = vadd.f32 %v72, %v144
    %v146 = vpop.f32.mrb[0].mxu0
    %147 = vmatprep.mubr.bf16.mxu0 0
    %148 = vmatmul.mubr.bf16.gmra.mrb[0].mxu0 %v94
    %v149 = vpop.f32.mrb[0].mxu0
    %v150 = vadd.f32 %v72, %v149
    %v151 = vpop.f32.mrb[0].mxu0
    %v152 = vpop.f32.mrb[0].mxu0
    %v153 = vadd.f32 %v72, %v152
    %v154 = vpop.f32.mrb[0].mxu0
    %155 = vmatprep.mubr.bf16.mxu0 0
    %156 = vmatmul.mubr.bf16.gmra.mrb[0].mxu0 %v97
    %v157 = vpop.f32.mrb[0].mxu0
    %v158 = vadd.f32 %v72, %v157
    %v159 = vpop.f32.mrb[0].mxu0
    %v160 = vpop.f32.mrb[0].mxu0
    %v161 = vadd.f32 %v72, %v160
    %v162 = vpop.f32.mrb[0].mxu0
    %163 = vdwg.mxu0
    %v164 = vtanh.pop %v134
    %v165 = vtanh.pop %v137
    %v166 = vtanh.pop %v142
    %v167 = vtanh.pop %v145
    %v168 = vtanh.pop %v150
    %v169 = vtanh.pop %v153
    %v170 = vtanh.pop %v158
    %v171 = vtanh.pop %v161
    %v173 = vlaneseq
    %v174 = vshrl.u32 %v173, 7
    %v175 = vsub.s32 0, %v174
    %v176 = vrot.slane %v63, %v175
    %v178 = vmul.f32 %v164, %v176
    %v179 = vmul.f32 %v165, %v176
    %v180 = vmul.f32 %v166, %v176
    %v181 = vmul.f32 %v167, %v176
    %v182 = vmul.f32 %v168, %v176
    %v183 = vmul.f32 %v169, %v176
    %v184 = vmul.f32 %v170, %v176
    %v185 = vmul.f32 %v171, %v176
    %v186 = vsel %vm86, %v178, 0.0
    %187 = vadd.xlane.f32.xlu0 %v186
    %v188 = vpop.xlane.xlu0 %187
    %v189 = vsel %vm86, %v179, 0.0
    %190 = vadd.xlane.f32.xlu0 %v189
    %v191 = vpop.xlane.xlu0 %190
    %v192 = vsel %vm86, %v180, 0.0
    %193 = vadd.xlane.f32.xlu0 %v192
    %v194 = vpop.xlane.xlu0 %193
    %v195 = vsel %vm86, %v181, 0.0
    %196 = vadd.xlane.f32.xlu0 %v195
    %v197 = vpop.xlane.xlu0 %196
    %v198 = vsel %vm86, %v182, 0.0
    %199 = vadd.xlane.f32.xlu0 %v198
    %v200 = vpop.xlane.xlu0 %199
    %v201 = vsel %vm86, %v183, 0.0
    %202 = vadd.xlane.f32.xlu0 %v201
    %v203 = vpop.xlane.xlu0 %202
    %v204 = vsel %vm86, %v184, 0.0
    %205 = vadd.xlane.f32.xlu0 %v204
    %v206 = vpop.xlane.xlu0 %205
    %v207 = vsel %vm86, %v185, 0.0
    %208 = vadd.xlane.f32.xlu0 %v207
    %v209 = vpop.xlane.xlu0 %208
    %v218 = vlaneseq
    %v219 = vand.u32 %v218, 127
    %v220 = vlaneseq
    %v221 = vshrl.u32 %v220, 7
    %v222 = vsub.s32 %v219, %v221
    %v223 = vrot.slane %v188, %v222
    %v224 = vlaneseq
    %v225 = vshrl.u32 %v224, 7
    %v226 = vsub.s32 %v219, %v225
    %v227 = vrot.slane %v191, %v226
    %v228 = vlaneseq
    %v229 = vshrl.u32 %v228, 7
    %v230 = vsub.s32 %v219, %v229
    %v231 = vrot.slane %v194, %v230
    %v232 = vlaneseq
    %v233 = vshrl.u32 %v232, 7
    %v234 = vsub.s32 %v219, %v233
    %v235 = vrot.slane %v197, %v234
    %v236 = vlaneseq
    %v237 = vshrl.u32 %v236, 7
    %v238 = vsub.s32 %v219, %v237
    %v239 = vrot.slane %v200, %v238
    %v240 = vlaneseq
    %v241 = vshrl.u32 %v240, 7
    %v242 = vsub.s32 %v219, %v241
    %v243 = vrot.slane %v203, %v242
    %v244 = vlaneseq
    %v245 = vshrl.u32 %v244, 7
    %v246 = vsub.s32 %v219, %v245
    %v247 = vrot.slane %v206, %v246
    %v248 = vlaneseq
    %v249 = vshrl.u32 %v248, 7
    %v250 = vsub.s32 %v219, %v249
    %v251 = vrot.slane %v209, %v250
    %vm252 = vcmask 1041409
    %v253 = vsel %vm252, %v227, %v223
    %vm254 = vcmask 1042434
    %v255 = vsel %vm254, %v231, %v253
    %vm256 = vcmask 1043459
    %v257 = vsel %vm256, %v235, %v255
    %vm258 = vcmask 1044484
    %v259 = vsel %vm258, %v239, %v257
    %vm260 = vcmask 1045509
    %v261 = vsel %vm260, %v243, %v259
    %vm262 = vcmask 1046534
    %v263 = vsel %vm262, %v247, %v261
    %vm264 = vcmask 1047559
    %v265 = vsel %vm264, %v251, %v263
    %vm267 = vcmask 64512
    %v268 = vsel %vm267, %v265, -inf
    %269 = vmax.xlane.f32.xlu0 %v268
    %v270 = vpop.xlane.xlu0 %269
    %v272 = vlaneseq
    %v273 = vshrl.u32 %v272, 7
    %v274 = vsub.s32 0, %v273
    %v275 = vrot.slane %v270, %v274
    %v276 = vlaneseq
    %v277 = vshrl.u32 %v276, 7
    %v278 = vsub.s32 1, %v277
    %v279 = vrot.slane %v270, %v278
    %v280 = vlaneseq
    %v281 = vshrl.u32 %v280, 7
    %v282 = vsub.s32 2, %v281
    %v283 = vrot.slane %v270, %v282
    %v284 = vlaneseq
    %v285 = vshrl.u32 %v284, 7
    %v286 = vsub.s32 3, %v285
    %v287 = vrot.slane %v270, %v286
    %v288 = vlaneseq
    %v289 = vshrl.u32 %v288, 7
    %v290 = vsub.s32 4, %v289
    %v291 = vrot.slane %v270, %v290
    %v292 = vlaneseq
    %v293 = vshrl.u32 %v292, 7
    %v294 = vsub.s32 5, %v293
    %v295 = vrot.slane %v270, %v294
    %v296 = vlaneseq
    %v297 = vshrl.u32 %v296, 7
    %v298 = vsub.s32 6, %v297
    %v299 = vrot.slane %v270, %v298
    %v300 = vlaneseq
    %v301 = vshrl.u32 %v300, 7
    %v302 = vsub.s32 7, %v301
    %v303 = vrot.slane %v270, %v302
    %v312 = vsub.f32 %v188, %v275
    %v313 = vsub.f32 %v191, %v279
    %v314 = vsub.f32 %v194, %v283
    %v315 = vsub.f32 %v197, %v287
    %v316 = vsub.f32 %v200, %v291
    %v317 = vsub.f32 %v203, %v295
    %v318 = vsub.f32 %v206, %v299
    %v319 = vsub.f32 %v209, %v303
    %v320 = vmul.f32 %v312, 1.442695
    %v321 = vpow.pop %v320
    %v322 = vmul.f32 %v313, 1.442695
    %v323 = vpow.pop %v322
    %v324 = vmul.f32 %v314, 1.442695
    %v325 = vpow.pop %v324
    %v326 = vmul.f32 %v315, 1.442695
    %v327 = vpow.pop %v326
    %v328 = vmul.f32 %v316, 1.442695
    %v329 = vpow.pop %v328
    %v330 = vmul.f32 %v317, 1.442695
    %v331 = vpow.pop %v330
    %v332 = vmul.f32 %v318, 1.442695
    %v333 = vpow.pop %v332
    %v334 = vmul.f32 %v319, 1.442695
    %v335 = vpow.pop %v334
    %344 = vset.pattern.permute.xlu0 0
    %345 = vperm.xlu0 %344, %v321
    %v346 = vpop.permute.xlu0 %345
    %347 = vset.pattern.permute.xlu0 0
    %348 = vperm.xlu0 %347, %v323
    %v349 = vpop.permute.xlu0 %348
    %350 = vset.pattern.permute.xlu0 0
    %351 = vperm.xlu0 %350, %v325
    %v352 = vpop.permute.xlu0 %351
    %353 = vset.pattern.permute.xlu0 0
    %354 = vperm.xlu0 %353, %v327
    %v355 = vpop.permute.xlu0 %354
    %356 = vset.pattern.permute.xlu0 0
    %357 = vperm.xlu0 %356, %v329
    %v358 = vpop.permute.xlu0 %357
    %359 = vset.pattern.permute.xlu0 0
    %360 = vperm.xlu0 %359, %v331
    %v361 = vpop.permute.xlu0 %360
    %362 = vset.pattern.permute.xlu0 0
    %363 = vperm.xlu0 %362, %v333
    %v364 = vpop.permute.xlu0 %363
    %365 = vset.pattern.permute.xlu0 0
    %366 = vperm.xlu0 %365, %v335
    %v367 = vpop.permute.xlu0 %366
    %v368 = vlaneseq
    %v369 = vshrl.u32 %v368, 7
    %v370 = vsub.s32 %v219, %v369
    %v371 = vrot.slane %v346, %v370
    %v372 = vlaneseq
    %v373 = vshrl.u32 %v372, 7
    %v374 = vsub.s32 %v219, %v373
    %v375 = vrot.slane %v349, %v374
    %v376 = vlaneseq
    %v377 = vshrl.u32 %v376, 7
    %v378 = vsub.s32 %v219, %v377
    %v379 = vrot.slane %v352, %v378
    %v380 = vlaneseq
    %v381 = vshrl.u32 %v380, 7
    %v382 = vsub.s32 %v219, %v381
    %v383 = vrot.slane %v355, %v382
    %v384 = vlaneseq
    %v385 = vshrl.u32 %v384, 7
    %v386 = vsub.s32 %v219, %v385
    %v387 = vrot.slane %v358, %v386
    %v388 = vlaneseq
    %v389 = vshrl.u32 %v388, 7
    %v390 = vsub.s32 %v219, %v389
    %v391 = vrot.slane %v361, %v390
    %v392 = vlaneseq
    %v393 = vshrl.u32 %v392, 7
    %v394 = vsub.s32 %v219, %v393
    %v395 = vrot.slane %v364, %v394
    %v396 = vlaneseq
    %v397 = vshrl.u32 %v396, 7
    %v398 = vsub.s32 %v219, %v397
    %v399 = vrot.slane %v367, %v398
    %v400 = vsel %vm252, %v375, %v371
    %v401 = vsel %vm254, %v379, %v400
    %v402 = vsel %vm256, %v383, %v401
    %v403 = vsel %vm258, %v387, %v402
    %v404 = vsel %vm260, %v391, %v403
    %v405 = vsel %vm262, %v395, %v404
    %v406 = vsel %vm264, %v399, %v405
    %v408 = vsel %vm267, %v406, 0.0
    %409 = vadd.xlane.f32.xlu0 %v408
    %v410 = vpop.xlane.xlu0 %409
    %v412 = vlaneseq
    %v413 = vshrl.u32 %v412, 7
    %v414 = vsub.s32 0, %v413
    %v415 = vrot.slane %v410, %v414
    %v416 = vlaneseq
    %v417 = vshrl.u32 %v416, 7
    %v418 = vsub.s32 1, %v417
    %v419 = vrot.slane %v410, %v418
    %v420 = vlaneseq
    %v421 = vshrl.u32 %v420, 7
    %v422 = vsub.s32 2, %v421
    %v423 = vrot.slane %v410, %v422
    %v424 = vlaneseq
    %v425 = vshrl.u32 %v424, 7
    %v426 = vsub.s32 3, %v425
    %v427 = vrot.slane %v410, %v426
    %v428 = vlaneseq
    %v429 = vshrl.u32 %v428, 7
    %v430 = vsub.s32 4, %v429
    %v431 = vrot.slane %v410, %v430
    %v432 = vlaneseq
    %v433 = vshrl.u32 %v432, 7
    %v434 = vsub.s32 5, %v433
    %v435 = vrot.slane %v410, %v434
    %v436 = vlaneseq
    %v437 = vshrl.u32 %v436, 7
    %v438 = vsub.s32 6, %v437
    %v439 = vrot.slane %v410, %v438
    %v440 = vlaneseq
    %v441 = vshrl.u32 %v440, 7
    %v442 = vsub.s32 7, %v441
    %v443 = vrot.slane %v410, %v442
    %v452 = vrcp.pop %v415
    %v453 = vmul.f32 %v321, %v452
    %v454 = vrcp.pop %v419
    %v455 = vmul.f32 %v323, %v454
    %v456 = vrcp.pop %v423
    %v457 = vmul.f32 %v325, %v456
    %v458 = vrcp.pop %v427
    %v459 = vmul.f32 %v327, %v458
    %v460 = vrcp.pop %v431
    %v461 = vmul.f32 %v329, %v460
    %v462 = vrcp.pop %v435
    %v463 = vmul.f32 %v331, %v462
    %v464 = vrcp.pop %v439
    %v465 = vmul.f32 %v333, %v464
    %v466 = vrcp.pop %v443
    %v467 = vmul.f32 %v335, %v466
    %469 = vset.pattern.permute.xlu0 0
    %470 = vperm.xlu0 %469, %v453
    %v471 = vpop.permute.xlu0 %470
    %474 = vset.pattern.permute.xlu0 0
    %475 = vperm.xlu0 %474, %v455
    %v476 = vpop.permute.xlu0 %475
    %479 = vset.pattern.permute.xlu0 0
    %480 = vperm.xlu0 %479, %v457
    %v481 = vpop.permute.xlu0 %480
    %484 = vset.pattern.permute.xlu0 0
    %485 = vperm.xlu0 %484, %v459
    %v486 = vpop.permute.xlu0 %485
    %489 = vset.pattern.permute.xlu0 0
    %490 = vperm.xlu0 %489, %v461
    %v491 = vpop.permute.xlu0 %490
    %494 = vset.pattern.permute.xlu0 0
    %495 = vperm.xlu0 %494, %v463
    %v496 = vpop.permute.xlu0 %495
    %499 = vset.pattern.permute.xlu0 0
    %500 = vperm.xlu0 %499, %v465
    %v501 = vpop.permute.xlu0 %500
    %504 = vset.pattern.permute.xlu0 0
    %505 = vperm.xlu0 %504, %v467
    %v506 = vpop.permute.xlu0 %505
    %v508 = vmul.f32 %v50, %v471
    %v509 = vmul.f32 %v51, %v476
    %v510 = vmul.f32 %v52, %v481
    %v511 = vmul.f32 %v53, %v486
    %v512 = vmul.f32 %v54, %v491
    %v513 = vmul.f32 %v55, %v496
    %v514 = vmul.f32 %v56, %v501
    %v515 = vmul.f32 %v57, %v506
    %v516 = vsel %vm86, %v508, 0.0
    %v517 = vrot.slane %v516, 4
    %v518 = vadd.f32 %v516, %v517
    %v519 = vrot.slane %v518, 2
    %v520 = vadd.f32 %v518, %v519
    %v521 = vrot.slane %v520, 1
    %v522 = vadd.f32 %v520, %v521
    %v523 = vsel %vm86, %v509, 0.0
    %v524 = vrot.slane %v523, 4
    %v525 = vadd.f32 %v523, %v524
    %v526 = vrot.slane %v525, 2
    %v527 = vadd.f32 %v525, %v526
    %v528 = vrot.slane %v527, 1
    %v529 = vadd.f32 %v527, %v528
    %v530 = vsel %vm86, %v510, 0.0
    %v531 = vrot.slane %v530, 4
    %v532 = vadd.f32 %v530, %v531
    %v533 = vrot.slane %v532, 2
    %v534 = vadd.f32 %v532, %v533
    %v535 = vrot.slane %v534, 1
    %v536 = vadd.f32 %v534, %v535
    %v537 = vsel %vm86, %v511, 0.0
    %v538 = vrot.slane %v537, 4
    %v539 = vadd.f32 %v537, %v538
    %v540 = vrot.slane %v539, 2
    %v541 = vadd.f32 %v539, %v540
    %v542 = vrot.slane %v541, 1
    %v543 = vadd.f32 %v541, %v542
    %v544 = vsel %vm86, %v512, 0.0
    %v545 = vrot.slane %v544, 4
    %v546 = vadd.f32 %v544, %v545
    %v547 = vrot.slane %v546, 2
    %v548 = vadd.f32 %v546, %v547
    %v549 = vrot.slane %v548, 1
    %v550 = vadd.f32 %v548, %v549
    %v551 = vsel %vm86, %v513, 0.0
    %v552 = vrot.slane %v551, 4
    %v553 = vadd.f32 %v551, %v552
    %v554 = vrot.slane %v553, 2
    %v555 = vadd.f32 %v553, %v554
    %v556 = vrot.slane %v555, 1
    %v557 = vadd.f32 %v555, %v556
    %v558 = vsel %vm86, %v514, 0.0
    %v559 = vrot.slane %v558, 4
    %v560 = vadd.f32 %v558, %v559
    %v561 = vrot.slane %v560, 2
    %v562 = vadd.f32 %v560, %v561
    %v563 = vrot.slane %v562, 1
    %v564 = vadd.f32 %v562, %v563
    %v565 = vsel %vm86, %v515, 0.0
    %v566 = vrot.slane %v565, 4
    %v567 = vadd.f32 %v565, %v566
    %v568 = vrot.slane %v567, 2
    %v569 = vadd.f32 %v567, %v568
    %v570 = vrot.slane %v569, 1
    %v571 = vadd.f32 %v569, %v570
    %v580 = vsel %vm252, %v529, %v522
    %v581 = vsel %vm254, %v536, %v580
    %v582 = vsel %vm256, %v543, %v581
    %v583 = vsel %vm258, %v550, %v582
    %v584 = vsel %vm260, %v557, %v583
    %v585 = vsel %vm262, %v564, %v584
    %v586 = vsel %vm264, %v571, %v585
    %588 = vst.msk [vmem:[#allocation7] sm:$0xff] %vm86, %v586
    %v589 = vlaneseq
    %v590 = vshrl.u32 %v589, 7
    %v591 = vsub.s32 %v219, %v590
    %v592 = vrot.slane %v471, %v591
    %v593 = vlaneseq
    %v594 = vshrl.u32 %v593, 7
    %v595 = vsub.s32 %v219, %v594
    %v596 = vrot.slane %v476, %v595
    %v597 = vlaneseq
    %v598 = vshrl.u32 %v597, 7
    %v599 = vsub.s32 %v219, %v598
    %v600 = vrot.slane %v481, %v599
    %v601 = vlaneseq
    %v602 = vshrl.u32 %v601, 7
    %v603 = vsub.s32 %v219, %v602
    %v604 = vrot.slane %v486, %v603
    %v605 = vlaneseq
    %v606 = vshrl.u32 %v605, 7
    %v607 = vsub.s32 %v219, %v606
    %v608 = vrot.slane %v491, %v607
    %v609 = vlaneseq
    %v610 = vshrl.u32 %v609, 7
    %v611 = vsub.s32 %v219, %v610
    %v612 = vrot.slane %v496, %v611
    %v613 = vlaneseq
    %v614 = vshrl.u32 %v613, 7
    %v615 = vsub.s32 %v219, %v614
    %v616 = vrot.slane %v501, %v615
    %v617 = vlaneseq
    %v618 = vshrl.u32 %v617, 7
    %v619 = vsub.s32 %v219, %v618
    %v620 = vrot.slane %v506, %v619
    %v621 = vsel %vm252, %v596, %v592
    %v622 = vsel %vm254, %v600, %v621
    %v623 = vsel %vm256, %v604, %v622
    %v624 = vsel %vm258, %v608, %v623
    %v625 = vsel %vm260, %v612, %v624
    %v626 = vsel %vm262, %v616, %v625
    %v627 = vsel %vm264, %v620, %v626
    %629 = vst.msk [vmem:[#allocation8] sm:$0xff] %vm267, %v627
    // Predicated region
    $region26: #{tpu_custom_call.1} parent=1 // pred_check
      _
    $region27: #{tpu_custom_call.1} parent=1 // pred_check_branch
      %631 = sbr.rel (0) target = $region29
    $region28: #{tpu_custom_call.1} parent=1 // pred_region
      %s633 = ssub.s32 128, 128
      %634 = vsyncadd [#allocation4], %s633
      %s636 = sshll.u32 [#allocation7], 4
      %s637 = int_to_ptr.vmem [resolvable:$true] %s636
      %639 = dma.vmem_to_hbm [thread:$0]  %s637, 128, %s4, [#allocation4]
    $region29: #{tpu_custom_call.1} parent=1 // pred_fallthru
      _
    // Predicated region
    $region30: #{tpu_custom_call.1} parent=1 // pred_check
      _
    $region31: #{tpu_custom_call.1} parent=1 // pred_check_branch
      %641 = sbr.rel (0) target = $region33
    $region32: #{tpu_custom_call.1} parent=1 // pred_region
      %s643 = ssub.s32 128, 128
      %644 = vsyncadd [#allocation9], %s643
      %s646 = sshll.u32 [#allocation8], 4
      %s647 = int_to_ptr.vmem [resolvable:$true] %s646
      %649 = dma.vmem_to_hbm [thread:$0]  %s647, 128, %s5, [#allocation9]
    $region33: #{tpu_custom_call.1} parent=1 // pred_fallthru
      _
    // Predicated region
    $region34: #{tpu_custom_call.1} parent=1 // pred_check
      _
    $region35: #{tpu_custom_call.1} parent=1 // pred_check_branch
      %651 = sbr.rel (0) target = $region37
    $region36: #{tpu_custom_call.1} parent=1 // pred_region
      %652 = dma.done [#allocation4], 128
    $region37: #{tpu_custom_call.1} parent=1 // pred_fallthru
      _
    // Predicated region
    $region38: #{tpu_custom_call.1} parent=1 // pred_check
      _
    $region39: #{tpu_custom_call.1} parent=1 // pred_check_branch
      %654 = sbr.rel (0) target = $region41
    $region40: #{tpu_custom_call.1} parent=1 // pred_region
      %655 = dma.done [#allocation9], 128
    $region41: #{tpu_custom_call.1} parent=1 // pred_fallthru
      _
    %656 = vsyncpa [#allocation3], 1
    %657 = vsyncpa [#allocation6], 1
    %658 = vsyncpa [#allocation4], 1
    %659 = vsyncpa [#allocation9], 1

</llo_original>
